<compile_context>
chip_gen: v7x
topology: tpu7x:2x2x1
jax: 0.10.0
libtpu: 0.0.40
codegen_flags: <defaults>
</compile_context>

<pallas_src>
import functools

import jax
import jax.numpy as jnp
from jax.experimental import pallas as pl
from jax.experimental.pallas import tpu as pltpu

LANE = 128       # vreg lane width
SUBLANE = 8      # f32 sublane width
BF16_MIN_K = 512 # contraction depth above which the bf16 MXU path pays off (v6e/v7x)


def _round_up(x, m):
    return (x + m - 1) // m * m


def _padded_d_out(d_out):
    """Lane-padding policy for the output feature dim.

    - multiple of 128: already lane dense, no pad
    - tiny d_out (<= 128): full-extent block (masked vst) beats writing 4x the output
      bytes plus a wrapper-side slice pass -> no pad
    - otherwise pad to the next multiple of 128 (pad fraction is small, stores unmasked)
    """
    if d_out % LANE == 0 or d_out <= LANE:
        return d_out
    return _round_up(d_out, LANE)


def prepare_mixed_layer_params(w_lin, b_lin, pos_weights, bias):
    """One-time weight preprocessing (hoisted out of the per-call path).

    Returns (w_lin_T, pos_weights**2, bias+b_lin folded, d_out), all f32, columns padded
    (if needed) to the lane-padding policy width.
    """
    d_out = pos_weights.shape[1]
    d_out_p = _padded_d_out(d_out)
    pad = d_out_p - d_out

    wlin_t = w_lin.T.astype(jnp.float32)                         # (d_in, d_out)
    pw2 = jnp.square(pos_weights.astype(jnp.float32))            # bounding_op hoisted here
    b_fold = (bias.astype(jnp.float32)
              + b_lin.astype(jnp.float32)).reshape(1, d_out)     # (1, d_out)
    if pad:
        wlin_t = jnp.pad(wlin_t, ((0, 0), (0, pad)))
        pw2 = jnp.pad(pw2, ((0, 0), (0, pad)))
        b_fold = jnp.pad(b_fold, ((0, 0), (0, pad)))
    return wlin_t, pw2, b_fold, d_out


def mixed_layer_kernel(x_ref, xb_ref, wlin_ref, pw2_ref, b_ref, o_ref, *, mxu_dtype):
    """One row block of: tanh(X @ W_lin.T + x_bounded @ pos_weights**2 + (bias + b_lin)).

    x_ref    : (bm, d_in)
    xb_ref   : (bm, d_in_bounded)
    wlin_ref : (d_in, d_out_p)          resident, already transposed
    pw2_ref  : (d_in_bounded, d_out_p)  resident, already squared (bounding op)
    b_ref    : (1, d_out_p)             resident, bias + b_lin folded
    o_ref    : (bm, d_out_p)
    """
    x = x_ref[...]
    xb = xb_ref[...]
    wl = wlin_ref[...]
    pw = pw2_ref[...]
    if mxu_dtype != jnp.float32:
        # MXU-bound regime (large K) on v6e/v7x: bf16 operands, f32 accumulation.
        x = x.astype(mxu_dtype)
        xb = xb.astype(mxu_dtype)
        wl = wl.astype(mxu_dtype)
        pw = pw.astype(mxu_dtype)
    acc = jnp.dot(x, wl, preferred_element_type=jnp.float32)
    acc = acc + jnp.dot(xb, pw, preferred_element_type=jnp.float32)
    # Bias add (VPU) + tanh (EUP) stay f32 (v5e has no bf16 VPU/EUP).
    o_ref[...] = jnp.tanh(acc + b_ref[...])


def mixed_layer_forward(X, x_bounded, w_lin=None, b_lin=None, pos_weights=None, bias=None,
                        *, params=None, block_rows=1024):
    """X: (B, d_in), x_bounded: (B, d_in_bounded).

    Pass either the raw parameters (w_lin (d_out,d_in), b_lin (d_out,), pos_weights
    (d_in_bounded,d_out), bias (d_out,)) or a preprocessed `params` tuple from
    prepare_mixed_layer_params (preferred when the layer is reused across calls).
    """
    B, d_in = X.shape
    d_in_bounded = x_bounded.shape[1]
    K = d_in + d_in_bounded

    if params is None:
        params = prepare_mixed_layer_params(w_lin, b_lin, pos_weights, bias)
    wlin_t, pw2, b_fold, d_out = params
    d_out_p = wlin_t.shape[1]

    # bf16 MXU operands only when the contraction is deep enough to be MXU-bound;
    # at small K the kernel is HBM/epilogue-bound and the cast buys nothing.
    mxu_dtype = jnp.bfloat16 if K >= BF16_MIN_K else jnp.float32

    # Row tiling: guarantee >= 2 row blocks whenever B allows it so both v7x TensorCores
    # get work from the "parallel" grid axis; large B uses block_rows-sized tiles.
    block_rows = max(SUBLANE, _round_up(block_rows, SUBLANE))
    if B <= block_rows:
        bm = min(_round_up(B, SUBLANE),
                 max(SUBLANE, _round_up(pl.cdiv(B, 2), SUBLANE)))
    else:
        bm = block_rows
    B_p = _round_up(B, bm)

    x = X.astype(jnp.float32)
    xb = x_bounded.astype(jnp.float32)
    if B_p != B:
        x = jnp.pad(x, ((0, B_p - B), (0, 0)))
        xb = jnp.pad(xb, ((0, B_p - B), (0, 0)))
    grid = (B_p // bm,)

    cost = pl.CostEstimate(
        flops=2 * B_p * K * d_out_p + B_p * d_out_p,
        transcendentals=B_p * d_out_p,
        bytes_accessed=4 * (B_p * K + K * d_out_p + d_out_p + B_p * d_out_p),
    )

    def run(const_buffered):
        def const_spec(shape):
            if const_buffered:
                # Resident operands (constant index_map): double-buffering is pure waste,
                # single buffer halves their VMEM footprint (important on v7x: 64 MiB/TC).
                return pl.BlockSpec(shape, lambda i: (0, 0), pipeline_mode=pl.Buffered(1))
            return pl.BlockSpec(shape, lambda i: (0, 0))

        return pl.pallas_call(
            functools.partial(mixed_layer_kernel, mxu_dtype=mxu_dtype),
            out_shape=jax.ShapeDtypeStruct((B_p, d_out_p), jnp.float32),
            grid=grid,
            in_specs=[
                pl.BlockSpec((bm, d_in), lambda i: (i, 0)),           # X row block
                pl.BlockSpec((bm, d_in_bounded), lambda i: (i, 0)),   # x_bounded row block
                const_spec((d_in, d_out_p)),                          # W_lin.T (resident)
                const_spec((d_in_bounded, d_out_p)),                  # pos_weights**2 (resident)
                const_spec((1, d_out_p)),                             # folded bias (resident)
            ],
            out_specs=pl.BlockSpec((bm, d_out_p), lambda i: (i, 0)),
            compiler_params=pltpu.CompilerParams(
                dimension_semantics=("parallel",),   # v7x: shard row blocks over both TCs
            ),
            cost_estimate=cost,
        )(x, xb, wlin_t, pw2, b_fold)

    try:
        out = run(True)
    except Exception:
        # pipeline_mode / pl.Buffered not supported by this jax build: fall back to the
        # default (double-buffered) specs — identical numerics, slightly more VMEM.
        out = run(False)

    if B_p != B or d_out_p != d_out:
        out = out[:B, :d_out]
    return out


def reference_forward(X, x_bounded, w_lin, b_lin, pos_weights, bias):
    return jnp.tanh(x_bounded @ (pos_weights ** 2) + bias + (X @ w_lin.T + b_lin))


if __name__ == "__main__":
    # Small shapes consistent with the module's forward
    B = 8
    d_in = 32
    d_in_bounded = 16
    d_out = 32

    key = jax.random.PRNGKey(0)
    k1, k2, k3, k4, k5, k6 = jax.random.split(key, 6)

    # Deterministic synthetic parameters (torch.randn / Linear init analogue)
    pos_weights = jax.random.normal(k1, (d_in_bounded, d_out), dtype=jnp.float32)
    bias = jax.random.normal(k2, (d_out,), dtype=jnp.float32)
    w_lin = jax.random.normal(k3, (d_out, d_in), dtype=jnp.float32) * (1.0 / jnp.sqrt(d_in))
    b_lin = jax.random.normal(k4, (d_out,), dtype=jnp.float32) * (1.0 / jnp.sqrt(d_in))

    # Inputs
    X = jax.random.normal(k5, (B, d_in), dtype=jnp.float32)
    x_bounded = jax.random.normal(k6, (B, d_in_bounded), dtype=jnp.float32)

    # One-time parameter preprocessing (reused across calls).
    params = prepare_mixed_layer_params(w_lin, b_lin, pos_weights, bias)
    params = jax.block_until_ready(params)

    out = mixed_layer_forward(X, x_bounded, params=params)
    out = jax.block_until_ready(out)

    ref = reference_forward(X, x_bounded, w_lin, b_lin, pos_weights, bias)
    assert out.shape == (B, d_out)
    assert jnp.allclose(out, ref, atol=1e-5, rtol=1e-5), "mismatch vs reference"

    print("KERNEL_OK")
</pallas_src>

<mosaic_0001>
module attributes {stable_mosaic.version = 11 : i64} {
  func.func @mixed_layer_kernel(%arg0: i32, %arg1: memref<8x32xf32, #tpu.memory_space<vmem>>, %arg2: memref<8x16xf32, #tpu.memory_space<vmem>>, %arg3: memref<32x32xf32, #tpu.memory_space<vmem>>, %arg4: memref<16x32xf32, #tpu.memory_space<vmem>>, %arg5: memref<1x32xf32, #tpu.memory_space<vmem>>, %arg6: memref<8x32xf32, #tpu.memory_space<vmem>>) attributes {dimension_semantics = [#tpu.dimension_semantics<parallel>], iteration_bounds = array<i64: 1>, scalar_prefetch = 0 : i64, scratch_operands = 0 : i64, tpu.core_type = #tpu.core_type<tc>, window_params = [{transform_indices = @transform_0, window_bounds = array<i64: 8, 32>}, {transform_indices = @transform_1, window_bounds = array<i64: 8, 16>}, {pipeline_mode = #tpu.pipeline_mode<synchronous>, transform_indices = @transform_2, window_bounds = array<i64: 32, 32>}, {pipeline_mode = #tpu.pipeline_mode<synchronous>, transform_indices = @transform_3, window_bounds = array<i64: 16, 32>}, {pipeline_mode = #tpu.pipeline_mode<synchronous>, transform_indices = @transform_4, window_bounds = array<i64: 1, 32>}, {transform_indices = @transform_5, window_bounds = array<i64: 8, 32>}]} {
    %c0 = arith.constant 0 : index
    %c0_0 = arith.constant 0 : index
    %0 = vector.load %arg1[%c0, %c0_0] : memref<8x32xf32, #tpu.memory_space<vmem>>, vector<8x32xf32>
    %c0_1 = arith.constant 0 : index
    %c0_2 = arith.constant 0 : index
    %1 = vector.load %arg2[%c0_1, %c0_2] : memref<8x16xf32, #tpu.memory_space<vmem>>, vector<8x16xf32>
    %c0_3 = arith.constant 0 : index
    %c0_4 = arith.constant 0 : index
    %2 = vector.load %arg3[%c0_3, %c0_4] : memref<32x32xf32, #tpu.memory_space<vmem>>, vector<32x32xf32>
    %c0_5 = arith.constant 0 : index
    %c0_6 = arith.constant 0 : index
    %3 = vector.load %arg4[%c0_5, %c0_6] : memref<16x32xf32, #tpu.memory_space<vmem>>, vector<16x32xf32>
    %cst = arith.constant dense<0.000000e+00> : vector<8x32xf32>
    %4 = tpu.matmul %0, %2, %cst {dimension_numbers = #tpu.dot_dimension_numbers<[1], [0], [0], [1], [0, 0, 1, 1], [], []>} : vector<8x32xf32>, vector<32x32xf32>, vector<8x32xf32> -> vector<8x32xf32>
    %cst_7 = arith.constant dense<0.000000e+00> : vector<8x32xf32>
    %5 = tpu.matmul %1, %3, %cst_7 {dimension_numbers = #tpu.dot_dimension_numbers<[1], [0], [0], [1], [0, 0, 1, 1], [], []>} : vector<8x16xf32>, vector<16x32xf32>, vector<8x32xf32> -> vector<8x32xf32>
    %6 = arith.addf %4, %5 : vector<8x32xf32>
    %c0_8 = arith.constant 0 : index
    %c0_9 = arith.constant 0 : index
    %7 = vector.load %arg5[%c0_8, %c0_9] : memref<1x32xf32, #tpu.memory_space<vmem>>, vector<1x32xf32>
    %8 = vector.broadcast %7 : vector<1x32xf32> to vector<8x32xf32>
    %9 = arith.addf %6, %8 : vector<8x32xf32>
    %10 = math.tanh %9 : vector<8x32xf32>
    %c0_10 = arith.constant 0 : index
    %c0_11 = arith.constant 0 : index
    %11 = vector.load %arg6[%c0_10, %c0_11] : memref<8x32xf32, #tpu.memory_space<vmem>>, vector<8x32xf32>
    tpu.vector_store %arg6[%c0_10, %c0_11], %10 {strides = array<i32>} : memref<8x32xf32, #tpu.memory_space<vmem>>, vector<8x32xf32>,
    return
  }
  func.func @transform_0(%arg0: i32) -> (i32, i32) {
    %c0_i32 = arith.constant 0 : i32
    %c0_i32_0 = arith.constant 0 : i32
    return %arg0, %c0_i32 : i32, i32
  }
  func.func @transform_1(%arg0: i32) -> (i32, i32) {
    %c0_i32 = arith.constant 0 : i32
    %c0_i32_0 = arith.constant 0 : i32
    return %arg0, %c0_i32 : i32, i32
  }
  func.func @transform_2(%arg0: i32) -> (i32, i32) {
    %c0_i32 = arith.constant 0 : i32
    %c0_i32_0 = arith.constant 0 : i32
    %c0_i32_1 = arith.constant 0 : i32
    return %c0_i32, %c0_i32_0 : i32, i32
  }
  func.func @transform_3(%arg0: i32) -> (i32, i32) {
    %c0_i32 = arith.constant 0 : i32
    %c0_i32_0 = arith.constant 0 : i32
    %c0_i32_1 = arith.constant 0 : i32
    return %c0_i32, %c0_i32_0 : i32, i32
  }
  func.func @transform_4(%arg0: i32) -> (i32, i32) {
    %c0_i32 = arith.constant 0 : i32
    %c0_i32_0 = arith.constant 0 : i32
    %c0_i32_1 = arith.constant 0 : i32
    return %c0_i32, %c0_i32_0 : i32, i32
  }
  func.func @transform_5(%arg0: i32) -> (i32, i32) {
    %c0_i32 = arith.constant 0 : i32
    %c0_i32_0 = arith.constant 0 : i32
    return %arg0, %c0_i32 : i32, i32
  }
}

module attributes {stable_mosaic.version = 11 : i64} {
  func.func @mixed_layer_kernel(%arg0: i32, %arg1: memref<8x32xf32, #tpu.memory_space<vmem>>, %arg2: memref<8x16xf32, #tpu.memory_space<vmem>>, %arg3: memref<32x32xf32, #tpu.memory_space<vmem>>, %arg4: memref<16x32xf32, #tpu.memory_space<vmem>>, %arg5: memref<1x32xf32, #tpu.memory_space<vmem>>, %arg6: memref<8x32xf32, #tpu.memory_space<vmem>>) attributes {dimension_semantics = [#tpu.dimension_semantics<parallel>], iteration_bounds = array<i64: 1>, scalar_prefetch = 0 : i64, scratch_operands = 0 : i64, tpu.core_type = #tpu.core_type<tc>, window_params = [{transform_indices = @transform_0, window_bounds = array<i64: 8, 32>}, {transform_indices = @transform_1, window_bounds = array<i64: 8, 16>}, {pipeline_mode = #tpu.pipeline_mode<synchronous>, transform_indices = @transform_2, window_bounds = array<i64: 32, 32>}, {pipeline_mode = #tpu.pipeline_mode<synchronous>, transform_indices = @transform_3, window_bounds = array<i64: 16, 32>}, {pipeline_mode = #tpu.pipeline_mode<synchronous>, transform_indices = @transform_4, window_bounds = array<i64: 1, 32>}, {transform_indices = @transform_5, window_bounds = array<i64: 8, 32>}]} {
    %c0 = arith.constant 0 : index
    %c0_0 = arith.constant 0 : index
    %0 = vector.load %arg1[%c0, %c0_0] : memref<8x32xf32, #tpu.memory_space<vmem>>, vector<8x32xf32>
    %c0_1 = arith.constant 0 : index
    %c0_2 = arith.constant 0 : index
    %1 = vector.load %arg2[%c0_1, %c0_2] : memref<8x16xf32, #tpu.memory_space<vmem>>, vector<8x16xf32>
    %c0_3 = arith.constant 0 : index
    %c0_4 = arith.constant 0 : index
    %2 = vector.load %arg3[%c0_3, %c0_4] : memref<32x32xf32, #tpu.memory_space<vmem>>, vector<32x32xf32>
    %c0_5 = arith.constant 0 : index
    %c0_6 = arith.constant 0 : index
    %3 = vector.load %arg4[%c0_5, %c0_6] : memref<16x32xf32, #tpu.memory_space<vmem>>, vector<16x32xf32>
    %cst = arith.constant dense<0.000000e+00> : vector<8x32xf32>
    %4 = tpu.matmul %0, %2, %cst {dimension_numbers = #tpu.dot_dimension_numbers<[1], [0], [0], [1], [0, 0, 1, 1], [], []>} : vector<8x32xf32>, vector<32x32xf32>, vector<8x32xf32> -> vector<8x32xf32>
    %cst_7 = arith.constant dense<0.000000e+00> : vector<8x32xf32>
    %5 = tpu.matmul %1, %3, %cst_7 {dimension_numbers = #tpu.dot_dimension_numbers<[1], [0], [0], [1], [0, 0, 1, 1], [], []>} : vector<8x16xf32>, vector<16x32xf32>, vector<8x32xf32> -> vector<8x32xf32>
    %6 = arith.addf %4, %5 : vector<8x32xf32>
    %c0_8 = arith.constant 0 : index
    %c0_9 = arith.constant 0 : index
    %7 = vector.load %arg5[%c0_8, %c0_9] : memref<1x32xf32, #tpu.memory_space<vmem>>, vector<1x32xf32>
    %8 = vector.broadcast %7 : vector<1x32xf32> to vector<8x32xf32>
    %9 = arith.addf %6, %8 : vector<8x32xf32>
    %10 = math.tanh %9 : vector<8x32xf32>
    %c0_10 = arith.constant 0 : index
    %c0_11 = arith.constant 0 : index
    %11 = vector.load %arg6[%c0_10, %c0_11] : memref<8x32xf32, #tpu.memory_space<vmem>>, vector<8x32xf32>
    tpu.vector_store %arg6[%c0_10, %c0_11], %10 {strides = array<i32>} : memref<8x32xf32, #tpu.memory_space<vmem>>, vector<8x32xf32>,
    return
  }
  func.func @transform_0(%arg0: i32) -> (i32, i32) {
    %c0_i32 = arith.constant 0 : i32
    %c0_i32_0 = arith.constant 0 : i32
    return %arg0, %c0_i32 : i32, i32
  }
  func.func @transform_1(%arg0: i32) -> (i32, i32) {
    %c0_i32 = arith.constant 0 : i32
    %c0_i32_0 = arith.constant 0 : i32
    return %arg0, %c0_i32 : i32, i32
  }
  func.func @transform_2(%arg0: i32) -> (i32, i32) {
    %c0_i32 = arith.constant 0 : i32
    %c0_i32_0 = arith.constant 0 : i32
    %c0_i32_1 = arith.constant 0 : i32
    return %c0_i32, %c0_i32_0 : i32, i32
  }
  func.func @transform_3(%arg0: i32) -> (i32, i32) {
    %c0_i32 = arith.constant 0 : i32
    %c0_i32_0 = arith.constant 0 : i32
    %c0_i32_1 = arith.constant 0 : i32
    return %c0_i32, %c0_i32_0 : i32, i32
  }
  func.func @transform_4(%arg0: i32) -> (i32, i32) {
    %c0_i32 = arith.constant 0 : i32
    %c0_i32_0 = arith.constant 0 : i32
    %c0_i32_1 = arith.constant 0 : i32
    return %c0_i32, %c0_i32_0 : i32, i32
  }
  func.func @transform_5(%arg0: i32) -> (i32, i32) {
    %c0_i32 = arith.constant 0 : i32
    %c0_i32_0 = arith.constant 0 : i32
    return %arg0, %c0_i32 : i32, i32
  }
}

</mosaic_0001>

<llo_original>
// kernel: tpu_custom_call.1
$region0: #{tpu_custom_call.1}
  #allocation0 [shape = 'u32[]', space=smem, size = 0x4, offset = 0x4, fixed_abs, tag = 'smem constant byte address 0x4 - core index']
  #allocation1 [shape = 'u32[144,128]{1,0:T(1,128)}', space=vmem, size = 0x12000, scoped, tag = 'internal scratch']
  %s0 = inlined_call_operand.hbm [shape: f32[8,32], index: 0, kind: input, shape index: {}]
  %s1 = inlined_call_operand.hbm [shape: f32[8,16], index: 1, kind: input, shape index: {}]
  %s2 = inlined_call_operand.hbm [shape: f32[32,32], index: 2, kind: input, shape index: {}]
  %s3 = inlined_call_operand.hbm [shape: f32[16,32], index: 3, kind: input, shape index: {}]
  %s4 = inlined_call_operand.vmem [shape: f32[1,32], index: 4, kind: input, shape index: {}]
  %s5 = inlined_call_operand.hbm [shape: f32[8,32], index: 5, kind: output, shape index: {}]
  %s6 = sld [smem:[#allocation0]]
  $region46: #{tpu_custom_call.1} parent=0
    _
  %s8 = ssub.s32 1, %s6
  %s9 = scalar_select 0, %s8, %s6
  $region1: #{tpu_custom_call.1} parent=0
    #allocation2 [shape = 'u8[4096]{0}', space=vmem, size = 0x1000, scoped, tag = 'input window, operand 0, single buffered']
    #allocation3 [shape = 's32[1]{0}', space=sflag, size = 0x4, scoped, tag = 'scoped memory for tpu_custom_call.1']
    #allocation4 [shape = 's32[1]{0}', space=sflag, size = 0x4, scoped, tag = 'scoped memory for tpu_custom_call.1']
    #allocation5 [shape = 'u8[4096]{0}', space=vmem, size = 0x1000, scoped, tag = 'input window, operand 1, single buffered']
    #allocation6 [shape = 's32[1]{0}', space=sflag, size = 0x4, scoped, tag = 'scoped memory for tpu_custom_call.1']
    #allocation7 [shape = 'u8[16384]{0}', space=vmem, size = 0x4000, scoped, tag = 'input window, operand 2, single buffered']
    #allocation8 [shape = 'u8[8192]{0}', space=vmem, size = 0x2000, scoped, tag = 'input window, operand 3, single buffered']
    #allocation9 [shape = 's32[1]{0}', space=sflag, size = 0x4, scoped, tag = 'scoped memory for tpu_custom_call.1']
    #allocation10 [shape = 'u8[4096]{0}', space=vmem, size = 0x1000, scoped, tag = 'output window, operand 0, single buffered']
    %10 = vsyncpa [#allocation3], 0
    %11 = vsyncpa [#allocation6], 0
    %12 = vsyncpa [#allocation9], 0
    %13 = vsyncpa [#allocation4], 0
    // Predicated region
    $region2: #{tpu_custom_call.1} parent=1 // pred_check
      _
    $region3: #{tpu_custom_call.1} parent=1 // pred_check_branch
      %15 = sbr.rel (0) target = $region5
    $region4: #{tpu_custom_call.1} parent=1 // pred_region
      %s17 = ssub.s32 128, 128
      %18 = vsyncadd [#allocation3], %s17
      %s20 = sshll.u32 [#allocation2], 4
      %s21 = int_to_ptr.vmem [resolvable:$true] %s20
      %23 = dma.hbm_to_vmem [thread:$0]  %s0, 128, %s21, [#allocation3]
    $region5: #{tpu_custom_call.1} parent=1 // pred_fallthru
      _
    // Predicated region
    $region6: #{tpu_custom_call.1} parent=1 // pred_check
      _
    $region7: #{tpu_custom_call.1} parent=1 // pred_check_branch
      %25 = sbr.rel (0) target = $region9
    $region8: #{tpu_custom_call.1} parent=1 // pred_region
      %s27 = ssub.s32 128, 128
      %28 = vsyncadd [#allocation6], %s27
      %s30 = sshll.u32 [#allocation5], 4
      %s31 = int_to_ptr.vmem [resolvable:$true] %s30
      %33 = dma.hbm_to_vmem [thread:$0]  %s1, 128, %s31, [#allocation6]
    $region9: #{tpu_custom_call.1} parent=1 // pred_fallthru
      _
    // Predicated region
    $region10: #{tpu_custom_call.1} parent=1 // pred_check
      _
    $region11: #{tpu_custom_call.1} parent=1 // pred_check_branch
      %35 = sbr.rel (0) target = $region13
    $region12: #{tpu_custom_call.1} parent=1 // pred_region
      %s37 = ssub.s32 512, 512
      %38 = vsyncadd [#allocation6], %s37
      %s39 = sshll.u32 [#allocation7], 4
      %s40 = int_to_ptr.vmem [resolvable:$true] %s39
      %45 = dma.hbm_to_vmem [thread:$0]  %s2, 512, %s40, [#allocation6], 128, 128, 8
    $region13: #{tpu_custom_call.1} parent=1 // pred_fallthru
      _
    // Predicated region
    $region14: #{tpu_custom_call.1} parent=1 // pred_check
      _
    $region15: #{tpu_custom_call.1} parent=1 // pred_check_branch
      %47 = sbr.rel (0) target = $region17
    $region16: #{tpu_custom_call.1} parent=1 // pred_region
      %s49 = ssub.s32 256, 256
      %50 = vsyncadd [#allocation9], %s49
      %s51 = sshll.u32 [#allocation8], 4
      %s52 = int_to_ptr.vmem [resolvable:$true] %s51
      %57 = dma.hbm_to_vmem [thread:$0]  %s3, 256, %s52, [#allocation9], 128, 128, 8
    $region17: #{tpu_custom_call.1} parent=1 // pred_fallthru
      _
    // Predicated region
    $region18: #{tpu_custom_call.1} parent=1 // pred_check
      _
    $region19: #{tpu_custom_call.1} parent=1 // pred_check_branch
      %59 = sbr.rel (0) target = $region21
    $region20: #{tpu_custom_call.1} parent=1 // pred_region
      _
    $region21: #{tpu_custom_call.1} parent=1 // pred_fallthru
      _
    // Predicated region
    $region22: #{tpu_custom_call.1} parent=1 // pred_check
      _
    $region23: #{tpu_custom_call.1} parent=1 // pred_check_branch
      %61 = sbr.rel (0) target = $region25
    $region24: #{tpu_custom_call.1} parent=1 // pred_region
      %62 = dma.done [#allocation3], 128
    $region25: #{tpu_custom_call.1} parent=1 // pred_fallthru
      _
    // Predicated region
    $region26: #{tpu_custom_call.1} parent=1 // pred_check
      _
    $region27: #{tpu_custom_call.1} parent=1 // pred_check_branch
      %64 = sbr.rel (0) target = $region29
    $region28: #{tpu_custom_call.1} parent=1 // pred_region
      %65 = dma.done [#allocation6], 128
    $region29: #{tpu_custom_call.1} parent=1 // pred_fallthru
      _
    // Predicated region
    $region30: #{tpu_custom_call.1} parent=1 // pred_check
      _
    $region31: #{tpu_custom_call.1} parent=1 // pred_check_branch
      %67 = sbr.rel (0) target = $region33
    $region32: #{tpu_custom_call.1} parent=1 // pred_region
      %68 = dma.done [#allocation6], 512
    $region33: #{tpu_custom_call.1} parent=1 // pred_fallthru
      _
    // Predicated region
    $region34: #{tpu_custom_call.1} parent=1 // pred_check
      _
    $region35: #{tpu_custom_call.1} parent=1 // pred_check_branch
      %70 = sbr.rel (0) target = $region37
    $region36: #{tpu_custom_call.1} parent=1 // pred_region
      %71 = dma.done [#allocation9], 256
    $region37: #{tpu_custom_call.1} parent=1 // pred_fallthru
      _
    %v72 = vld [vmem:[#allocation2] sm:$0xff]
    %v73 = vld [vmem:[#allocation5] sm:$0xff]
    %v74 = vld [vmem:[#allocation7] sm:$0xff]
    %v75 = vld [vmem:[#allocation7 + $0x8] sm:$0xff]
    %v76 = vld [vmem:[#allocation7 + $0x10] sm:$0xff]
    %v77 = vld [vmem:[#allocation7 + $0x18] sm:$0xff]
    %v78 = vld [vmem:[#allocation8] sm:$0xff]
    %v79 = vld [vmem:[#allocation8 + $0x8] sm:$0xff]
    %vm80 = vcmask 130048
    %v82 = vsel %vm80, %v73, 0
    %84 = vmatprep.subr.mxu0 0.0
    %85 = vmatpush1.msra.mxu0 %v78
    %86 = vmatprep.subr.mxu0 0.0
    %87 = vmatpush1.msra.mxu0 %v79
    %88 = vmatprep.subr.mxu0 0.0
    %89 = vmatpush1.msra.mxu0 0.0
    %90 = vmatprep.subr.mxu0 0.0
    %91 = vmatpush1.msra.mxu0 0.0
    %92 = vmatprep.subr.mxu0 0.0
    %93 = vmatpush1.msra.mxu0 0.0
    %94 = vmatprep.subr.mxu0 0.0
    %95 = vmatpush1.msra.mxu0 0.0
    %96 = vmatprep.subr.mxu0 0.0
    %97 = vmatpush1.msra.mxu0 0.0
    %98 = vmatprep.subr.mxu0 0.0
    %99 = vmatpush1.msra.mxu0 0.0
    %100 = vmatprep.subr.mxu0 0.0
    %101 = vmatpush1.msra.mxu0 0.0
    %102 = vmatprep.subr.mxu0 0.0
    %103 = vmatpush1.msra.mxu0 0.0
    %104 = vmatprep.subr.mxu0 0.0
    %105 = vmatpush1.msra.mxu0 0.0
    %106 = vmatprep.subr.mxu0 0.0
    %107 = vmatpush1.msra.mxu0 0.0
    %108 = vmatprep.subr.mxu0 0.0
    %109 = vmatpush1.msra.mxu0 0.0
    %110 = vmatprep.subr.mxu0 0.0
    %111 = vmatpush1.msra.mxu0 0.0
    %112 = vmatprep.subr.mxu0 0.0
    %113 = vmatpush1.msra.mxu0 0.0
    %114 = vmatprep.subr.mxu0 0.0
    %115 = vmatpush1.msra.mxu0 0.0
    %116 = vmatprep.subr.mxu0 0.0
    %117 = vmatpush1.msra.mxu0 0.0
    %118 = vmatprep.subr.mxu0 0.0
    %119 = vmatpush1.msra.mxu0 0.0
    %120 = vmatprep.subr.mxu0 0.0
    %121 = vmatpush1.msra.mxu0 0.0
    %122 = vmatprep.subr.mxu0 0.0
    %123 = vmatpush1.msra.mxu0 0.0
    %124 = vmatprep.subr.mxu0 0.0
    %125 = vmatpush1.msra.mxu0 0.0
    %126 = vmatprep.subr.mxu0 0.0
    %127 = vmatpush1.msra.mxu0 0.0
    %128 = vmatprep.subr.mxu0 0.0
    %129 = vmatpush1.msra.mxu0 0.0
    %130 = vmatprep.subr.mxu0 0.0
    %131 = vmatpush1.msra.mxu0 0.0
    %132 = vmatprep.subr.mxu0 0.0
    %133 = vmatpush1.msra.mxu0 0.0
    %134 = vmatprep.subr.mxu0 0.0
    %135 = vmatpush1.msra.mxu0 0.0
    %136 = vmatprep.subr.mxu0 0.0
    %137 = vmatpush1.msra.mxu0 0.0
    %138 = vmatprep.subr.mxu0 0.0
    %139 = vmatpush1.msra.mxu0 0.0
    %140 = vmatprep.subr.mxu0 0.0
    %141 = vmatpush1.msra.mxu0 0.0
    %142 = vmatprep.subr.mxu0 0.0
    %143 = vmatpush1.msra.mxu0 0.0
    %144 = vmatprep.subr.mxu0 0.0
    %145 = vmatpush1.msra.mxu0 0.0
    %146 = vmatprep.subr.mxu0 0.0
    %147 = vmatpush1.msra.mxu0 0.0
    %148 = vmatprep.mubr.f32.mxu0 0.0
    %149 = vmatmul.mubr.f32.gmra.mrb[0].mxu0 %v82
    %v150 = vpop.f32.mrb[0].mxu0
    %v151 = vadd.f32 0.0, %v150
    %v152 = vpop.f32.mrb[0].mxu0
    %153 = vdwg.mxu0
    %vm154 = vcmask 261120
    %v156 = vsel %vm154, %v72, 0
    %158 = vmatprep.subr.mxu0 0.0
    %159 = vmatpush1.msra.mxu0 %v74
    %160 = vmatprep.subr.mxu0 0.0
    %161 = vmatpush1.msra.mxu0 %v75
    %162 = vmatprep.subr.mxu0 0.0
    %163 = vmatpush1.msra.mxu0 %v76
    %164 = vmatprep.subr.mxu0 0.0
    %165 = vmatpush1.msra.mxu0 %v77
    %166 = vmatprep.subr.mxu0 0.0
    %167 = vmatpush1.msra.mxu0 0.0
    %168 = vmatprep.subr.mxu0 0.0
    %169 = vmatpush1.msra.mxu0 0.0
    %170 = vmatprep.subr.mxu0 0.0
    %171 = vmatpush1.msra.mxu0 0.0
    %172 = vmatprep.subr.mxu0 0.0
    %173 = vmatpush1.msra.mxu0 0.0
    %174 = vmatprep.subr.mxu0 0.0
    %175 = vmatpush1.msra.mxu0 0.0
    %176 = vmatprep.subr.mxu0 0.0
    %177 = vmatpush1.msra.mxu0 0.0
    %178 = vmatprep.subr.mxu0 0.0
    %179 = vmatpush1.msra.mxu0 0.0
    %180 = vmatprep.subr.mxu0 0.0
    %181 = vmatpush1.msra.mxu0 0.0
    %182 = vmatprep.subr.mxu0 0.0
    %183 = vmatpush1.msra.mxu0 0.0
    %184 = vmatprep.subr.mxu0 0.0
    %185 = vmatpush1.msra.mxu0 0.0
    %186 = vmatprep.subr.mxu0 0.0
    %187 = vmatpush1.msra.mxu0 0.0
    %188 = vmatprep.subr.mxu0 0.0
    %189 = vmatpush1.msra.mxu0 0.0
    %190 = vmatprep.subr.mxu0 0.0
    %191 = vmatpush1.msra.mxu0 0.0
    %192 = vmatprep.subr.mxu0 0.0
    %193 = vmatpush1.msra.mxu0 0.0
    %194 = vmatprep.subr.mxu0 0.0
    %195 = vmatpush1.msra.mxu0 0.0
    %196 = vmatprep.subr.mxu0 0.0
    %197 = vmatpush1.msra.mxu0 0.0
    %198 = vmatprep.subr.mxu0 0.0
    %199 = vmatpush1.msra.mxu0 0.0
    %200 = vmatprep.subr.mxu0 0.0
    %201 = vmatpush1.msra.mxu0 0.0
    %202 = vmatprep.subr.mxu0 0.0
    %203 = vmatpush1.msra.mxu0 0.0
    %204 = vmatprep.subr.mxu0 0.0
    %205 = vmatpush1.msra.mxu0 0.0
    %206 = vmatprep.subr.mxu0 0.0
    %207 = vmatpush1.msra.mxu0 0.0
    %208 = vmatprep.subr.mxu0 0.0
    %209 = vmatpush1.msra.mxu0 0.0
    %210 = vmatprep.subr.mxu0 0.0
    %211 = vmatpush1.msra.mxu0 0.0
    %212 = vmatprep.subr.mxu0 0.0
    %213 = vmatpush1.msra.mxu0 0.0
    %214 = vmatprep.subr.mxu0 0.0
    %215 = vmatpush1.msra.mxu0 0.0
    %216 = vmatprep.subr.mxu0 0.0
    %217 = vmatpush1.msra.mxu0 0.0
    %218 = vmatprep.subr.mxu0 0.0
    %219 = vmatpush1.msra.mxu0 0.0
    %220 = vmatprep.subr.mxu0 0.0
    %221 = vmatpush1.msra.mxu0 0.0
    %222 = vmatprep.mubr.f32.mxu0 0.0
    %223 = vmatmul.mubr.f32.gmra.mrb[0].mxu0 %v156
    %v224 = vpop.f32.mrb[0].mxu0
    %v225 = vadd.f32 %v151, %v224
    %v226 = vpop.f32.mrb[0].mxu0
    %227 = vdwg.mxu0
    %v228 = vld [vmem:[%s4] sm:$0x1]
    %v230 = vlaneseq
    %v231 = vshrl.u32 %v230, 7
    %v232 = vsub.s32 0, %v231
    %v233 = vrot.slane %v228, %v232
    %v235 = vadd.f32 %v225, %v233
    %v236 = vtanh.pop %v235
    %237 = vst.msk [vmem:[#allocation10] sm:$0xff] %vm154, %v236
    // Predicated region
    $region38: #{tpu_custom_call.1} parent=1 // pred_check
      _
    $region39: #{tpu_custom_call.1} parent=1 // pred_check_branch
      %239 = sbr.rel (0) target = $region41
    $region40: #{tpu_custom_call.1} parent=1 // pred_region
      %s241 = ssub.s32 128, 128
      %242 = vsyncadd [#allocation4], %s241
      %s244 = sshll.u32 [#allocation10], 4
      %s245 = int_to_ptr.vmem [resolvable:$true] %s244
      %247 = dma.vmem_to_hbm [thread:$0]  %s245, 128, %s5, [#allocation4]
    $region41: #{tpu_custom_call.1} parent=1 // pred_fallthru
      _
    // Predicated region
    $region42: #{tpu_custom_call.1} parent=1 // pred_check
      _
    $region43: #{tpu_custom_call.1} parent=1 // pred_check_branch
      %249 = sbr.rel (0) target = $region45
    $region44: #{tpu_custom_call.1} parent=1 // pred_region
      %250 = dma.done [#allocation4], 128
    $region45: #{tpu_custom_call.1} parent=1 // pred_fallthru
      _
    %251 = vsyncpa [#allocation3], 1
    %252 = vsyncpa [#allocation6], 1
    %253 = vsyncpa [#allocation9], 1
    %254 = vsyncpa [#allocation4], 1

// kernel: tpu_custom_call.1
$region0: #{tpu_custom_call.1}
  #allocation0 [shape = 'u32[]', space=smem, size = 0x4, offset = 0x4, fixed_abs, tag = 'smem constant byte address 0x4 - core index']
  #allocation1 [shape = 'u32[144,128]{1,0:T(1,128)}', space=vmem, size = 0x12000, scoped, tag = 'internal scratch']
  %s0 = inlined_call_operand.hbm [shape: f32[8,32], index: 0, kind: input, shape index: {}]
  %s1 = inlined_call_operand.hbm [shape: f32[8,16], index: 1, kind: input, shape index: {}]
  %s2 = inlined_call_operand.hbm [shape: f32[32,32], index: 2, kind: input, shape index: {}]
  %s3 = inlined_call_operand.hbm [shape: f32[16,32], index: 3, kind: input, shape index: {}]
  %s4 = inlined_call_operand.vmem [shape: f32[1,32], index: 4, kind: input, shape index: {}]
  %s5 = inlined_call_operand.hbm [shape: f32[8,32], index: 5, kind: output, shape index: {}]
  %s6 = sld [smem:[#allocation0]]
  $region46: #{tpu_custom_call.1} parent=0
    _
  %s8 = ssub.s32 1, %s6
  %s9 = scalar_select 0, %s8, %s6
  $region1: #{tpu_custom_call.1} parent=0
    #allocation2 [shape = 'u8[4096]{0}', space=vmem, size = 0x1000, scoped, tag = 'input window, operand 0, single buffered']
    #allocation3 [shape = 's32[1]{0}', space=sflag, size = 0x4, scoped, tag = 'scoped memory for tpu_custom_call.1']
    #allocation4 [shape = 's32[1]{0}', space=sflag, size = 0x4, scoped, tag = 'scoped memory for tpu_custom_call.1']
    #allocation5 [shape = 'u8[4096]{0}', space=vmem, size = 0x1000, scoped, tag = 'input window, operand 1, single buffered']
    #allocation6 [shape = 's32[1]{0}', space=sflag, size = 0x4, scoped, tag = 'scoped memory for tpu_custom_call.1']
    #allocation7 [shape = 'u8[16384]{0}', space=vmem, size = 0x4000, scoped, tag = 'input window, operand 2, single buffered']
    #allocation8 [shape = 'u8[8192]{0}', space=vmem, size = 0x2000, scoped, tag = 'input window, operand 3, single buffered']
    #allocation9 [shape = 's32[1]{0}', space=sflag, size = 0x4, scoped, tag = 'scoped memory for tpu_custom_call.1']
    #allocation10 [shape = 'u8[4096]{0}', space=vmem, size = 0x1000, scoped, tag = 'output window, operand 0, single buffered']
    %10 = vsyncpa [#allocation3], 0
    %11 = vsyncpa [#allocation6], 0
    %12 = vsyncpa [#allocation9], 0
    %13 = vsyncpa [#allocation4], 0
    // Predicated region
    $region2: #{tpu_custom_call.1} parent=1 // pred_check
      _
    $region3: #{tpu_custom_call.1} parent=1 // pred_check_branch
      %15 = sbr.rel (0) target = $region5
    $region4: #{tpu_custom_call.1} parent=1 // pred_region
      %s17 = ssub.s32 128, 128
      %18 = vsyncadd [#allocation3], %s17
      %s20 = sshll.u32 [#allocation2], 4
      %s21 = int_to_ptr.vmem [resolvable:$true] %s20
      %23 = dma.hbm_to_vmem [thread:$0]  %s0, 128, %s21, [#allocation3]
    $region5: #{tpu_custom_call.1} parent=1 // pred_fallthru
      _
    // Predicated region
    $region6: #{tpu_custom_call.1} parent=1 // pred_check
      _
    $region7: #{tpu_custom_call.1} parent=1 // pred_check_branch
      %25 = sbr.rel (0) target = $region9
    $region8: #{tpu_custom_call.1} parent=1 // pred_region
      %s27 = ssub.s32 128, 128
      %28 = vsyncadd [#allocation6], %s27
      %s30 = sshll.u32 [#allocation5], 4
      %s31 = int_to_ptr.vmem [resolvable:$true] %s30
      %33 = dma.hbm_to_vmem [thread:$0]  %s1, 128, %s31, [#allocation6]
    $region9: #{tpu_custom_call.1} parent=1 // pred_fallthru
      _
    // Predicated region
    $region10: #{tpu_custom_call.1} parent=1 // pred_check
      _
    $region11: #{tpu_custom_call.1} parent=1 // pred_check_branch
      %35 = sbr.rel (0) target = $region13
    $region12: #{tpu_custom_call.1} parent=1 // pred_region
      %s37 = ssub.s32 512, 512
      %38 = vsyncadd [#allocation6], %s37
      %s39 = sshll.u32 [#allocation7], 4
      %s40 = int_to_ptr.vmem [resolvable:$true] %s39
      %45 = dma.hbm_to_vmem [thread:$0]  %s2, 512, %s40, [#allocation6], 128, 128, 8
    $region13: #{tpu_custom_call.1} parent=1 // pred_fallthru
      _
    // Predicated region
    $region14: #{tpu_custom_call.1} parent=1 // pred_check
      _
    $region15: #{tpu_custom_call.1} parent=1 // pred_check_branch
      %47 = sbr.rel (0) target = $region17
    $region16: #{tpu_custom_call.1} parent=1 // pred_region
      %s49 = ssub.s32 256, 256
      %50 = vsyncadd [#allocation9], %s49
      %s51 = sshll.u32 [#allocation8], 4
      %s52 = int_to_ptr.vmem [resolvable:$true] %s51
      %57 = dma.hbm_to_vmem [thread:$0]  %s3, 256, %s52, [#allocation9], 128, 128, 8
    $region17: #{tpu_custom_call.1} parent=1 // pred_fallthru
      _
    // Predicated region
    $region18: #{tpu_custom_call.1} parent=1 // pred_check
      _
    $region19: #{tpu_custom_call.1} parent=1 // pred_check_branch
      %59 = sbr.rel (0) target = $region21
    $region20: #{tpu_custom_call.1} parent=1 // pred_region
      _
    $region21: #{tpu_custom_call.1} parent=1 // pred_fallthru
      _
    // Predicated region
    $region22: #{tpu_custom_call.1} parent=1 // pred_check
      _
    $region23: #{tpu_custom_call.1} parent=1 // pred_check_branch
      %61 = sbr.rel (0) target = $region25
    $region24: #{tpu_custom_call.1} parent=1 // pred_region
      %62 = dma.done [#allocation3], 128
    $region25: #{tpu_custom_call.1} parent=1 // pred_fallthru
      _
    // Predicated region
    $region26: #{tpu_custom_call.1} parent=1 // pred_check
      _
    $region27: #{tpu_custom_call.1} parent=1 // pred_check_branch
      %64 = sbr.rel (0) target = $region29
    $region28: #{tpu_custom_call.1} parent=1 // pred_region
      %65 = dma.done [#allocation6], 128
    $region29: #{tpu_custom_call.1} parent=1 // pred_fallthru
      _
    // Predicated region
    $region30: #{tpu_custom_call.1} parent=1 // pred_check
      _
    $region31: #{tpu_custom_call.1} parent=1 // pred_check_branch
      %67 = sbr.rel (0) target = $region33
    $region32: #{tpu_custom_call.1} parent=1 // pred_region
      %68 = dma.done [#allocation6], 512
    $region33: #{tpu_custom_call.1} parent=1 // pred_fallthru
      _
    // Predicated region
    $region34: #{tpu_custom_call.1} parent=1 // pred_check
      _
    $region35: #{tpu_custom_call.1} parent=1 // pred_check_branch
      %70 = sbr.rel (0) target = $region37
    $region36: #{tpu_custom_call.1} parent=1 // pred_region
      %71 = dma.done [#allocation9], 256
    $region37: #{tpu_custom_call.1} parent=1 // pred_fallthru
      _
    %v72 = vld [vmem:[#allocation2] sm:$0xff]
    %v73 = vld [vmem:[#allocation5] sm:$0xff]
    %v74 = vld [vmem:[#allocation7] sm:$0xff]
    %v75 = vld [vmem:[#allocation7 + $0x8] sm:$0xff]
    %v76 = vld [vmem:[#allocation7 + $0x10] sm:$0xff]
    %v77 = vld [vmem:[#allocation7 + $0x18] sm:$0xff]
    %v78 = vld [vmem:[#allocation8] sm:$0xff]
    %v79 = vld [vmem:[#allocation8 + $0x8] sm:$0xff]
    %vm80 = vcmask 130048
    %v82 = vsel %vm80, %v73, 0
    %84 = vmatprep.subr.mxu0 0.0
    %85 = vmatpush1.msra.mxu0 %v78
    %86 = vmatprep.subr.mxu0 0.0
    %87 = vmatpush1.msra.mxu0 %v79
    %88 = vmatprep.subr.mxu0 0.0
    %89 = vmatpush1.msra.mxu0 0.0
    %90 = vmatprep.subr.mxu0 0.0
    %91 = vmatpush1.msra.mxu0 0.0
    %92 = vmatprep.subr.mxu0 0.0
    %93 = vmatpush1.msra.mxu0 0.0
    %94 = vmatprep.subr.mxu0 0.0
    %95 = vmatpush1.msra.mxu0 0.0
    %96 = vmatprep.subr.mxu0 0.0
    %97 = vmatpush1.msra.mxu0 0.0
    %98 = vmatprep.subr.mxu0 0.0
    %99 = vmatpush1.msra.mxu0 0.0
    %100 = vmatprep.subr.mxu0 0.0
    %101 = vmatpush1.msra.mxu0 0.0
    %102 = vmatprep.subr.mxu0 0.0
    %103 = vmatpush1.msra.mxu0 0.0
    %104 = vmatprep.subr.mxu0 0.0
    %105 = vmatpush1.msra.mxu0 0.0
    %106 = vmatprep.subr.mxu0 0.0
    %107 = vmatpush1.msra.mxu0 0.0
    %108 = vmatprep.subr.mxu0 0.0
    %109 = vmatpush1.msra.mxu0 0.0
    %110 = vmatprep.subr.mxu0 0.0
    %111 = vmatpush1.msra.mxu0 0.0
    %112 = vmatprep.subr.mxu0 0.0
    %113 = vmatpush1.msra.mxu0 0.0
    %114 = vmatprep.subr.mxu0 0.0
    %115 = vmatpush1.msra.mxu0 0.0
    %116 = vmatprep.subr.mxu0 0.0
    %117 = vmatpush1.msra.mxu0 0.0
    %118 = vmatprep.subr.mxu0 0.0
    %119 = vmatpush1.msra.mxu0 0.0
    %120 = vmatprep.subr.mxu0 0.0
    %121 = vmatpush1.msra.mxu0 0.0
    %122 = vmatprep.subr.mxu0 0.0
    %123 = vmatpush1.msra.mxu0 0.0
    %124 = vmatprep.subr.mxu0 0.0
    %125 = vmatpush1.msra.mxu0 0.0
    %126 = vmatprep.subr.mxu0 0.0
    %127 = vmatpush1.msra.mxu0 0.0
    %128 = vmatprep.subr.mxu0 0.0
    %129 = vmatpush1.msra.mxu0 0.0
    %130 = vmatprep.subr.mxu0 0.0
    %131 = vmatpush1.msra.mxu0 0.0
    %132 = vmatprep.subr.mxu0 0.0
    %133 = vmatpush1.msra.mxu0 0.0
    %134 = vmatprep.subr.mxu0 0.0
    %135 = vmatpush1.msra.mxu0 0.0
    %136 = vmatprep.subr.mxu0 0.0
    %137 = vmatpush1.msra.mxu0 0.0
    %138 = vmatprep.subr.mxu0 0.0
    %139 = vmatpush1.msra.mxu0 0.0
    %140 = vmatprep.subr.mxu0 0.0
    %141 = vmatpush1.msra.mxu0 0.0
    %142 = vmatprep.subr.mxu0 0.0
    %143 = vmatpush1.msra.mxu0 0.0
    %144 = vmatprep.subr.mxu0 0.0
    %145 = vmatpush1.msra.mxu0 0.0
    %146 = vmatprep.subr.mxu0 0.0
    %147 = vmatpush1.msra.mxu0 0.0
    %148 = vmatprep.mubr.f32.mxu0 0.0
    %149 = vmatmul.mubr.f32.gmra.mrb[0].mxu0 %v82
    %v150 = vpop.f32.mrb[0].mxu0
    %v151 = vadd.f32 0.0, %v150
    %v152 = vpop.f32.mrb[0].mxu0
    %153 = vdwg.mxu0
    %vm154 = vcmask 261120
    %v156 = vsel %vm154, %v72, 0
    %158 = vmatprep.subr.mxu0 0.0
    %159 = vmatpush1.msra.mxu0 %v74
    %160 = vmatprep.subr.mxu0 0.0
    %161 = vmatpush1.msra.mxu0 %v75
    %162 = vmatprep.subr.mxu0 0.0
    %163 = vmatpush1.msra.mxu0 %v76
    %164 = vmatprep.subr.mxu0 0.0
    %165 = vmatpush1.msra.mxu0 %v77
    %166 = vmatprep.subr.mxu0 0.0
    %167 = vmatpush1.msra.mxu0 0.0
    %168 = vmatprep.subr.mxu0 0.0
    %169 = vmatpush1.msra.mxu0 0.0
    %170 = vmatprep.subr.mxu0 0.0
    %171 = vmatpush1.msra.mxu0 0.0
    %172 = vmatprep.subr.mxu0 0.0
    %173 = vmatpush1.msra.mxu0 0.0
    %174 = vmatprep.subr.mxu0 0.0
    %175 = vmatpush1.msra.mxu0 0.0
    %176 = vmatprep.subr.mxu0 0.0
    %177 = vmatpush1.msra.mxu0 0.0
    %178 = vmatprep.subr.mxu0 0.0
    %179 = vmatpush1.msra.mxu0 0.0
    %180 = vmatprep.subr.mxu0 0.0
    %181 = vmatpush1.msra.mxu0 0.0
    %182 = vmatprep.subr.mxu0 0.0
    %183 = vmatpush1.msra.mxu0 0.0
    %184 = vmatprep.subr.mxu0 0.0
    %185 = vmatpush1.msra.mxu0 0.0
    %186 = vmatprep.subr.mxu0 0.0
    %187 = vmatpush1.msra.mxu0 0.0
    %188 = vmatprep.subr.mxu0 0.0
    %189 = vmatpush1.msra.mxu0 0.0
    %190 = vmatprep.subr.mxu0 0.0
    %191 = vmatpush1.msra.mxu0 0.0
    %192 = vmatprep.subr.mxu0 0.0
    %193 = vmatpush1.msra.mxu0 0.0
    %194 = vmatprep.subr.mxu0 0.0
    %195 = vmatpush1.msra.mxu0 0.0
    %196 = vmatprep.subr.mxu0 0.0
    %197 = vmatpush1.msra.mxu0 0.0
    %198 = vmatprep.subr.mxu0 0.0
    %199 = vmatpush1.msra.mxu0 0.0
    %200 = vmatprep.subr.mxu0 0.0
    %201 = vmatpush1.msra.mxu0 0.0
    %202 = vmatprep.subr.mxu0 0.0
    %203 = vmatpush1.msra.mxu0 0.0
    %204 = vmatprep.subr.mxu0 0.0
    %205 = vmatpush1.msra.mxu0 0.0
    %206 = vmatprep.subr.mxu0 0.0
    %207 = vmatpush1.msra.mxu0 0.0
    %208 = vmatprep.subr.mxu0 0.0
    %209 = vmatpush1.msra.mxu0 0.0
    %210 = vmatprep.subr.mxu0 0.0
    %211 = vmatpush1.msra.mxu0 0.0
    %212 = vmatprep.subr.mxu0 0.0
    %213 = vmatpush1.msra.mxu0 0.0
    %214 = vmatprep.subr.mxu0 0.0
    %215 = vmatpush1.msra.mxu0 0.0
    %216 = vmatprep.subr.mxu0 0.0
    %217 = vmatpush1.msra.mxu0 0.0
    %218 = vmatprep.subr.mxu0 0.0
    %219 = vmatpush1.msra.mxu0 0.0
    %220 = vmatprep.subr.mxu0 0.0
    %221 = vmatpush1.msra.mxu0 0.0
    %222 = vmatprep.mubr.f32.mxu0 0.0
    %223 = vmatmul.mubr.f32.gmra.mrb[0].mxu0 %v156
    %v224 = vpop.f32.mrb[0].mxu0
    %v225 = vadd.f32 %v151, %v224
    %v226 = vpop.f32.mrb[0].mxu0
    %227 = vdwg.mxu0
    %v228 = vld [vmem:[%s4] sm:$0x1]
    %v230 = vlaneseq
    %v231 = vshrl.u32 %v230, 7
    %v232 = vsub.s32 0, %v231
    %v233 = vrot.slane %v228, %v232
    %v235 = vadd.f32 %v225, %v233
    %v236 = vtanh.pop %v235
    %237 = vst.msk [vmem:[#allocation10] sm:$0xff] %vm154, %v236
    // Predicated region
    $region38: #{tpu_custom_call.1} parent=1 // pred_check
      _
    $region39: #{tpu_custom_call.1} parent=1 // pred_check_branch
      %239 = sbr.rel (0) target = $region41
    $region40: #{tpu_custom_call.1} parent=1 // pred_region
      %s241 = ssub.s32 128, 128
      %242 = vsyncadd [#allocation4], %s241
      %s244 = sshll.u32 [#allocation10], 4
      %s245 = int_to_ptr.vmem [resolvable:$true] %s244
      %247 = dma.vmem_to_hbm [thread:$0]  %s245, 128, %s5, [#allocation4]
    $region41: #{tpu_custom_call.1} parent=1 // pred_fallthru
      _
    // Predicated region
    $region42: #{tpu_custom_call.1} parent=1 // pred_check
      _
    $region43: #{tpu_custom_call.1} parent=1 // pred_check_branch
      %249 = sbr.rel (0) target = $region45
    $region44: #{tpu_custom_call.1} parent=1 // pred_region
      %250 = dma.done [#allocation4], 128
    $region45: #{tpu_custom_call.1} parent=1 // pred_fallthru
      _
    %251 = vsyncpa [#allocation3], 1
    %252 = vsyncpa [#allocation6], 1
    %253 = vsyncpa [#allocation9], 1
    %254 = vsyncpa [#allocation4], 1

</llo_original>
